<compile_context>
chip_gen: v5e
topology: v5e:2x2
jax: 0.10.0
libtpu: 0.0.40
codegen_flags: <defaults>
</compile_context>

<pallas_src>
import functools

import jax
import jax.numpy as jnp
import numpy as np
from jax.experimental import pallas as pl
from jax.experimental.pallas import tpu as pltpu


def _mlp_kernel(x_ref, w1_ref, b1_ref, wh_ref, bh_ref, w3_ref, b3_ref, o_ref,
                *, n_hidden_layers):
    """Full MLP for one lane-dense batch tile, entirely in VMEM/vregs.

    x_ref : (n_feats, TB) f32   packed [x0; v0; t; (f)] feature rows
    W1    : (H, n_feats)  f32   b1 : (H, 1) f32
    Wh    : (L, H, H)     f32/bf16   bh : (L, H, 1) f32
    W3    : (n_out, H)    f32/bf16   b3 : (n_out, 1) f32   (G, D pre-folded)
    out   : (n_out, TB)   f32
    """
    # Layer 1 on the MXU: (H, n_feats) @ (n_feats, TB) -> (H, TB), lane-dense.
    h = jnp.tanh(
        jnp.dot(w1_ref[...], x_ref[...], preferred_element_type=jnp.float32)
        + b1_ref[...])

    # Hidden layers: (H, H) @ (H, TB).  Weights may be bf16 (MXU-native on
    # v6e/v7x); accumulate in f32, bias add + tanh stay f32.
    for l in range(n_hidden_layers):
        h = jnp.tanh(
            jnp.dot(wh_ref[l], h.astype(wh_ref.dtype),
                    preferred_element_type=jnp.float32)
            + bh_ref[l])

    # Output layer (G/D already folded into W3/b3): unmasked lane-dense store.
    o_ref[...] = (
        jnp.dot(w3_ref[...], h.astype(w3_ref.dtype),
                preferred_element_type=jnp.float32)
        + b3_ref[...])


def osa_pinn_forward(x0, v0, t, params, f=None, G=0.0, D=1.0, *,
                     tile_b=4096, mxu_dtype=jnp.float32):
    """JAX wrapper reproducing osa_pinn_sdof.forward semantics.

    Returns (N, n_output), same as the torch module.
    NOTE: G and D are treated as scalars (the module's call paths only use
    scalars); pass jnp scalars if they vary per call to avoid retraces.
    `mxu_dtype=jnp.bfloat16` trades ~1e-3 accuracy for shorter MXU latency
    on v6e/v7x; the f32 default holds a 1e-5 tolerance.
    """
    w1, b1, wh, bh, w3, b3 = params
    H = w1.shape[0]
    n_out = w3.shape[0]
    n_hidden_layers = wh.shape[0]          # = n_layers - 1
    assert n_hidden_layers >= 1

    feats = [x0.reshape(-1), v0.reshape(-1), t.reshape(-1)]
    if f is not None:
        feats.append(f.reshape(-1))
    n_feats = len(feats)
    assert w1.shape[1] == n_feats

    N = feats[0].shape[0]

    # One packed (n_feats, N) input -> a single contiguous DMA per grid step.
    x = jnp.stack(feats, axis=0).astype(jnp.float32)

    # Lane-dense batch tiling.  tb is a multiple of 128, scales with N, and is
    # capped at round_up(cdiv(N,2), 128) so the grid has >= 2 steps whenever
    # possible (v7x megacore).  No pad-to-tile: the ragged last block is
    # handled by Pallas (OOB lanes stay lane-local and are never written back).
    lane = 128
    half_pad = ((-(-N // 2)) + lane - 1) // lane * lane
    tb = max(lane, min((int(tile_b) // lane) * lane, half_pad))
    grid = (pl.cdiv(N, tb),)

    # Fold scalar G, D into the output layer: y = G + D*(W3 h + b3)
    #                                           = (D*W3) h + (D*b3 + G).
    G = jnp.asarray(G, jnp.float32)
    D = jnp.asarray(D, jnp.float32)
    w3_eff = (D * w3.astype(jnp.float32)).astype(mxu_dtype)
    b3_eff = (D * b3.astype(jnp.float32) + G)

    kernel = functools.partial(_mlp_kernel, n_hidden_layers=n_hidden_layers)

    in_specs = [
        pl.BlockSpec((n_feats, tb), lambda i: (0, i)),               # packed feats
        pl.BlockSpec((H, n_feats), lambda i: (0, 0)),                # W1
        pl.BlockSpec((H, 1), lambda i: (0, 0)),                      # b1
        pl.BlockSpec((n_hidden_layers, H, H), lambda i: (0, 0, 0)),  # Wh
        pl.BlockSpec((n_hidden_layers, H, 1), lambda i: (0, 0, 0)),  # bh
        pl.BlockSpec((n_out, H), lambda i: (0, 0)),                  # W3'
        pl.BlockSpec((n_out, 1), lambda i: (0, 0)),                  # b3'
    ]

    # Advisory cost hint so XLA can schedule/overlap the custom call.
    flops = 2 * N * (n_feats * H + n_hidden_layers * H * H + H * n_out)
    transcendentals = N * H * (n_hidden_layers + 1)
    weight_bytes = sum(int(np.prod(a.shape)) * 4
                       for a in (w1, b1, wh, bh, w3, b3))
    bytes_accessed = N * (n_feats + n_out) * 4 + weight_bytes

    y = pl.pallas_call(
        kernel,
        out_shape=jax.ShapeDtypeStruct((n_out, N), jnp.float32),
        grid=grid,
        in_specs=in_specs,
        out_specs=pl.BlockSpec((n_out, tb), lambda i: (0, i)),
        compiler_params=pltpu.CompilerParams(
            dimension_semantics=("parallel",)),
        cost_estimate=pl.CostEstimate(
            flops=flops, transcendentals=transcendentals,
            bytes_accessed=bytes_accessed),
    )(x,
      w1.astype(jnp.float32), b1.astype(jnp.float32),
      wh.astype(mxu_dtype), bh.astype(jnp.float32),
      w3_eff, b3_eff)

    # Back to the torch convention (N, n_output).
    return jnp.transpose(y)


def init_params(key, n_input, n_hidden, n_layers, n_output):
    """Deterministic init mirroring nn.Linear (weights in (out, in) layout)."""
    ks = jax.random.split(key, 6)

    def uni(k, shape, fan_in):
        bound = 1.0 / np.sqrt(fan_in)
        return jax.random.uniform(k, shape, jnp.float32, -bound, bound)

    w1 = uni(ks[0], (n_hidden, n_input), n_input)
    b1 = uni(ks[1], (n_hidden, 1), n_input)
    wh = uni(ks[2], (n_layers - 1, n_hidden, n_hidden), n_hidden)
    bh = uni(ks[3], (n_layers - 1, n_hidden, 1), n_hidden)
    w3 = uni(ks[4], (n_output, n_hidden), n_hidden)
    b3 = uni(ks[5], (n_output, 1), n_hidden)
    return (w1, b1, wh, bh, w3, b3)


def reference_forward(x0, v0, t, params, f=None, G=0.0, D=1.0):
    cols = [x0.reshape(-1), v0.reshape(-1), t.reshape(-1)]
    if f is not None:
        cols.append(f.reshape(-1))
    x = jnp.stack(cols, axis=1).astype(jnp.float32)     # (N, n_input)
    w1, b1, wh, bh, w3, b3 = params
    h = jnp.tanh(x @ w1.T + b1[:, 0])
    for l in range(wh.shape[0]):
        h = jnp.tanh(h @ wh[l].T + bh[l, :, 0])
    return G + D * (h @ w3.T + b3[:, 0])


if __name__ == "__main__":
    # config-equivalent: n_hidden=32, n_layers=3, n_output=1
    n_hidden, n_layers, n_output = 32, 3, 1

    key = jax.random.PRNGKey(0)
    kp3, kp4, kx, kv, kt, kf = jax.random.split(key, 6)

    # Case 1: no forcing (n_input=3), lane-aligned batch, non-trivial G/D
    # (exercises the W3/b3 fold).
    params3 = init_params(kp3, 3, n_hidden, n_layers, n_output)
    N = 128
    x0 = jax.random.normal(kx, (N,), jnp.float32)
    v0 = jax.random.normal(kv, (N,), jnp.float32)
    t = jax.random.uniform(kt, (N,), jnp.float32)
    y = jax.block_until_ready(osa_pinn_forward(x0, v0, t, params3, G=0.25, D=1.5))
    y_ref = reference_forward(x0, v0, t, params3, G=0.25, D=1.5)
    np.testing.assert_allclose(np.asarray(y), np.asarray(y_ref),
                               rtol=1e-5, atol=1e-5)

    # Case 2: ragged batch (partial last block, no wrapper pad), default G/D.
    M = 100
    y2 = jax.block_until_ready(
        osa_pinn_forward(x0[:M], v0[:M], t[:M], params3))
    y2_ref = reference_forward(x0[:M], v0[:M], t[:M], params3)
    np.testing.assert_allclose(np.asarray(y2), np.asarray(y2_ref),
                               rtol=1e-5, atol=1e-5)

    # Case 3: forcing path (n_input=4), multi-step grid + ragged tail, and
    # bf16 MXU weights (loose tolerance; the f32 default keeps 1e-5).
    params4 = init_params(kp4, 4, n_hidden, n_layers, n_output)
    P = 300
    kx2, kv2, kt2, kf2 = jax.random.split(kf, 4)
    x0b = jax.random.normal(kx2, (P,), jnp.float32)
    v0b = jax.random.normal(kv2, (P,), jnp.float32)
    tpb = jax.random.uniform(kt2, (P,), jnp.float32)
    fpb = jax.random.normal(kf2, (P,), jnp.float32)
    y3 = jax.block_until_ready(
        osa_pinn_forward(x0b, v0b, tpb, params4, f=fpb,
                         mxu_dtype=jnp.bfloat16))
    y3_ref = reference_forward(x0b, v0b, tpb, params4, f=fpb)
    np.testing.assert_allclose(np.asarray(y3), np.asarray(y3_ref),
                               rtol=5e-2, atol=5e-2)

    # TODO(synk): calc_residuals / loss_func need autograd (torch.autograd.grad)
    # which is wrapper-level jax.grad over this forward, not in-kernel work.
    print("KERNEL_OK")
</pallas_src>

<mosaic_0001>
module attributes {stable_mosaic.version = 11 : i64} {
  func.func @_mlp_kernel(%arg0: i32, %arg1: memref<3x128xf32, #tpu.memory_space<vmem>>, %arg2: memref<32x3xf32, #tpu.memory_space<vmem>>, %arg3: memref<32x1xf32, #tpu.memory_space<vmem>>, %arg4: memref<2x32x32xf32, #tpu.memory_space<vmem>>, %arg5: memref<2x32x1xf32, #tpu.memory_space<vmem>>, %arg6: memref<1x32xf32, #tpu.memory_space<vmem>>, %arg7: memref<1x1xf32, #tpu.memory_space<vmem>>, %arg8: memref<1x128xf32, #tpu.memory_space<vmem>>) attributes {dimension_semantics = [#tpu.dimension_semantics<parallel>], iteration_bounds = array<i64: 1>, scalar_prefetch = 0 : i64, scratch_operands = 0 : i64, tpu.core_type = #tpu.core_type<tc>, window_params = [{transform_indices = @transform_0, window_bounds = array<i64: 3, 128>}, {pipeline_mode = #tpu.pipeline_mode<synchronous>, transform_indices = @transform_1, window_bounds = array<i64: 32, 3>}, {pipeline_mode = #tpu.pipeline_mode<synchronous>, transform_indices = @transform_2, window_bounds = array<i64: 32, 1>}, {pipeline_mode = #tpu.pipeline_mode<synchronous>, transform_indices = @transform_3, window_bounds = array<i64: 2, 32, 32>}, {pipeline_mode = #tpu.pipeline_mode<synchronous>, transform_indices = @transform_4, window_bounds = array<i64: 2, 32, 1>}, {pipeline_mode = #tpu.pipeline_mode<synchronous>, transform_indices = @transform_5, window_bounds = array<i64: 1, 32>}, {pipeline_mode = #tpu.pipeline_mode<synchronous>, transform_indices = @transform_6, window_bounds = array<i64: 1, 1>}, {transform_indices = @transform_7, window_bounds = array<i64: 1, 128>}]} {
    %c0 = arith.constant 0 : index
    %c0_0 = arith.constant 0 : index
    %0 = vector.load %arg2[%c0, %c0_0] : memref<32x3xf32, #tpu.memory_space<vmem>>, vector<32x3xf32>
    %c0_1 = arith.constant 0 : index
    %c0_2 = arith.constant 0 : index
    %1 = vector.load %arg1[%c0_1, %c0_2] : memref<3x128xf32, #tpu.memory_space<vmem>>, vector<3x128xf32>
    %cst = arith.constant dense<0.000000e+00> : vector<32x128xf32>
    %2 = tpu.matmul %0, %1, %cst {dimension_numbers = #tpu.dot_dimension_numbers<[1], [0], [0], [1], [0, 0, 1, 1], [], []>} : vector<32x3xf32>, vector<3x128xf32>, vector<32x128xf32> -> vector<32x128xf32>
    %c0_3 = arith.constant 0 : index
    %c0_4 = arith.constant 0 : index
    %3 = vector.load %arg3[%c0_3, %c0_4] : memref<32x1xf32, #tpu.memory_space<vmem>>, vector<32x1xf32>
    %4 = vector.broadcast %3 : vector<32x1xf32> to vector<32x128xf32>
    %5 = arith.addf %2, %4 : vector<32x128xf32>
    %6 = math.tanh %5 : vector<32x128xf32>
    %c0_5 = arith.constant 0 : index
    %c0_6 = arith.constant 0 : index
    %c0_7 = arith.constant 0 : index
    %7 = vector.load %arg4[%c0_5, %c0_6, %c0_7] : memref<2x32x32xf32, #tpu.memory_space<vmem>>, vector<1x32x32xf32>
    %8 = vector.shape_cast %7 : vector<1x32x32xf32> to vector<32x32xf32>
    %cst_8 = arith.constant dense<0.000000e+00> : vector<32x128xf32>
    %9 = tpu.matmul %8, %6, %cst_8 {dimension_numbers = #tpu.dot_dimension_numbers<[1], [0], [0], [1], [0, 0, 1, 1], [], []>} : vector<32x32xf32>, vector<32x128xf32>, vector<32x128xf32> -> vector<32x128xf32>
    %c0_9 = arith.constant 0 : index
    %c0_10 = arith.constant 0 : index
    %c0_11 = arith.constant 0 : index
    %10 = vector.load %arg5[%c0_9, %c0_10, %c0_11] : memref<2x32x1xf32, #tpu.memory_space<vmem>>, vector<1x32x1xf32>
    %11 = vector.shape_cast %10 : vector<1x32x1xf32> to vector<32x1xf32>
    %12 = vector.broadcast %11 : vector<32x1xf32> to vector<32x128xf32>
    %13 = arith.addf %9, %12 : vector<32x128xf32>
    %14 = math.tanh %13 : vector<32x128xf32>
    %c1 = arith.constant 1 : index
    %c0_12 = arith.constant 0 : index
    %c0_13 = arith.constant 0 : index
    %15 = vector.load %arg4[%c1, %c0_12, %c0_13] : memref<2x32x32xf32, #tpu.memory_space<vmem>>, vector<1x32x32xf32>
    %16 = vector.shape_cast %15 : vector<1x32x32xf32> to vector<32x32xf32>
    %cst_14 = arith.constant dense<0.000000e+00> : vector<32x128xf32>
    %17 = tpu.matmul %16, %14, %cst_14 {dimension_numbers = #tpu.dot_dimension_numbers<[1], [0], [0], [1], [0, 0, 1, 1], [], []>} : vector<32x32xf32>, vector<32x128xf32>, vector<32x128xf32> -> vector<32x128xf32>
    %c1_15 = arith.constant 1 : index
    %c0_16 = arith.constant 0 : index
    %c0_17 = arith.constant 0 : index
    %18 = vector.load %arg5[%c1_15, %c0_16, %c0_17] : memref<2x32x1xf32, #tpu.memory_space<vmem>>, vector<1x32x1xf32>
    %19 = vector.shape_cast %18 : vector<1x32x1xf32> to vector<32x1xf32>
    %20 = vector.broadcast %19 : vector<32x1xf32> to vector<32x128xf32>
    %21 = arith.addf %17, %20 : vector<32x128xf32>
    %22 = math.tanh %21 : vector<32x128xf32>
    %c0_18 = arith.constant 0 : index
    %c0_19 = arith.constant 0 : index
    %23 = vector.load %arg6[%c0_18, %c0_19] : memref<1x32xf32, #tpu.memory_space<vmem>>, vector<1x32xf32>
    %cst_20 = arith.constant dense<0.000000e+00> : vector<1x128xf32>
    %24 = tpu.matmul %23, %22, %cst_20 {dimension_numbers = #tpu.dot_dimension_numbers<[1], [0], [0], [1], [0, 0, 1, 1], [], []>} : vector<1x32xf32>, vector<32x128xf32>, vector<1x128xf32> -> vector<1x128xf32>
    %c0_21 = arith.constant 0 : index
    %c0_22 = arith.constant 0 : index
    %25 = vector.load %arg7[%c0_21, %c0_22] : memref<1x1xf32, #tpu.memory_space<vmem>>, vector<1x1xf32>
    %26 = vector.broadcast %25 : vector<1x1xf32> to vector<1x128xf32>
    %27 = arith.addf %24, %26 : vector<1x128xf32>
    %c0_23 = arith.constant 0 : index
    %c0_24 = arith.constant 0 : index
    %28 = vector.load %arg8[%c0_23, %c0_24] : memref<1x128xf32, #tpu.memory_space<vmem>>, vector<1x128xf32>
    tpu.vector_store %arg8[%c0_23, %c0_24], %27 {strides = array<i32>} : memref<1x128xf32, #tpu.memory_space<vmem>>, vector<1x128xf32>,
    return
  }
  func.func @transform_0(%arg0: i32) -> (i32, i32) {
    %c0_i32 = arith.constant 0 : i32
    %c0_i32_0 = arith.constant 0 : i32
    return %c0_i32, %arg0 : i32, i32
  }
  func.func @transform_1(%arg0: i32) -> (i32, i32) {
    %c0_i32 = arith.constant 0 : i32
    %c0_i32_0 = arith.constant 0 : i32
    %c0_i32_1 = arith.constant 0 : i32
    return %c0_i32, %c0_i32_0 : i32, i32
  }
  func.func @transform_2(%arg0: i32) -> (i32, i32) {
    %c0_i32 = arith.constant 0 : i32
    %c0_i32_0 = arith.constant 0 : i32
    %c0_i32_1 = arith.constant 0 : i32
    return %c0_i32, %c0_i32_0 : i32, i32
  }
  func.func @transform_3(%arg0: i32) -> (i32, i32, i32) {
    %c0_i32 = arith.constant 0 : i32
    %c0_i32_0 = arith.constant 0 : i32
    %c0_i32_1 = arith.constant 0 : i32
    %c0_i32_2 = arith.constant 0 : i32
    return %c0_i32, %c0_i32_0, %c0_i32_1 : i32, i32, i32
  }
  func.func @transform_4(%arg0: i32) -> (i32, i32, i32) {
    %c0_i32 = arith.constant 0 : i32
    %c0_i32_0 = arith.constant 0 : i32
    %c0_i32_1 = arith.constant 0 : i32
    %c0_i32_2 = arith.constant 0 : i32
    return %c0_i32, %c0_i32_0, %c0_i32_1 : i32, i32, i32
  }
  func.func @transform_5(%arg0: i32) -> (i32, i32) {
    %c0_i32 = arith.constant 0 : i32
    %c0_i32_0 = arith.constant 0 : i32
    %c0_i32_1 = arith.constant 0 : i32
    return %c0_i32, %c0_i32_0 : i32, i32
  }
  func.func @transform_6(%arg0: i32) -> (i32, i32) {
    %c0_i32 = arith.constant 0 : i32
    %c0_i32_0 = arith.constant 0 : i32
    %c0_i32_1 = arith.constant 0 : i32
    return %c0_i32, %c0_i32_0 : i32, i32
  }
  func.func @transform_7(%arg0: i32) -> (i32, i32) {
    %c0_i32 = arith.constant 0 : i32
    %c0_i32_0 = arith.constant 0 : i32
    return %c0_i32, %arg0 : i32, i32
  }
}

</mosaic_0001>

<llo_original>
// kernel: tpu_custom_call.1
$region0: #{tpu_custom_call.1}
  #allocation0 [shape = 'u32[]', space=smem, size = 0x4, offset = 0x4, fixed_abs, tag = 'smem constant byte address 0x4 - core index']
  #allocation1 [shape = 'u32[72,128]{1,0:T(1,128)}', space=vmem, size = 0x9000, scoped, tag = 'internal scratch']
  #allocation2 [shape = 'f32[1,1]{1,0:T(1,128)S(1)}', space=vmem, size = 0x200, scoped, tag = 'scoped memory for tpu_custom_call.1']
  %s0 = inlined_call_operand.vmem [shape: f32[3,128], index: 0, kind: input, shape index: {}]
  %s1 = inlined_call_operand.vmem [shape: f32[32,3], index: 1, kind: input, shape index: {}]
  %s2 = inlined_call_operand.vmem [shape: f32[32,1], index: 2, kind: input, shape index: {}]
  %s3 = inlined_call_operand.vmem [shape: f32[2,32,32], index: 3, kind: input, shape index: {}]
  %s4 = inlined_call_operand.vmem [shape: f32[2,32,1], index: 4, kind: input, shape index: {}]
  %s5 = inlined_call_operand.vmem [shape: f32[1,32], index: 5, kind: input, shape index: {}]
  %s6 = inlined_call_operand.<no memory space> [shape: f32[1,1], index: 6, kind: input, shape index: {}]
  %s7 = inlined_call_operand.hbm [shape: f32[1,128], index: 7, kind: output, shape index: {}]
  %s8 = sld [smem:[#allocation0]]
  $region38: #{tpu_custom_call.1} parent=0
    _
  %s10 = ssub.s32 1, %s8
  %s11 = scalar_select 0, %s10, %s8
  %v12 = vstv %s6
  %13 = vst [vmem:[#allocation2] sm:$0x1] %v12
  $region1: #{tpu_custom_call.1} parent=0
    #allocation3 [shape = 'u8[512]{0}', space=vmem, size = 0x400, scoped, tag = 'output window, operand 0, single buffered']
    #allocation4 [shape = 's32[1]{0}', space=sflag, size = 0x4, scoped, tag = 'scoped memory for tpu_custom_call.1']
    %14 = vsyncpa [#allocation4], 0
    // Predicated region
    $region2: #{tpu_custom_call.1} parent=1 // pred_check
      _
    $region3: #{tpu_custom_call.1} parent=1 // pred_check_branch
      %16 = sbr.rel (0) target = $region5
    $region4: #{tpu_custom_call.1} parent=1 // pred_region
      _
    $region5: #{tpu_custom_call.1} parent=1 // pred_fallthru
      _
    // Predicated region
    $region6: #{tpu_custom_call.1} parent=1 // pred_check
      _
    $region7: #{tpu_custom_call.1} parent=1 // pred_check_branch
      %18 = sbr.rel (0) target = $region9
    $region8: #{tpu_custom_call.1} parent=1 // pred_region
      _
    $region9: #{tpu_custom_call.1} parent=1 // pred_fallthru
      _
    // Predicated region
    $region10: #{tpu_custom_call.1} parent=1 // pred_check
      _
    $region11: #{tpu_custom_call.1} parent=1 // pred_check_branch
      %20 = sbr.rel (0) target = $region13
    $region12: #{tpu_custom_call.1} parent=1 // pred_region
      _
    $region13: #{tpu_custom_call.1} parent=1 // pred_fallthru
      _
    // Predicated region
    $region14: #{tpu_custom_call.1} parent=1 // pred_check
      _
    $region15: #{tpu_custom_call.1} parent=1 // pred_check_branch
      %22 = sbr.rel (0) target = $region17
    $region16: #{tpu_custom_call.1} parent=1 // pred_region
      _
    $region17: #{tpu_custom_call.1} parent=1 // pred_fallthru
      _
    // Predicated region
    $region18: #{tpu_custom_call.1} parent=1 // pred_check
      _
    $region19: #{tpu_custom_call.1} parent=1 // pred_check_branch
      %24 = sbr.rel (0) target = $region21
    $region20: #{tpu_custom_call.1} parent=1 // pred_region
      _
    $region21: #{tpu_custom_call.1} parent=1 // pred_fallthru
      _
    // Predicated region
    $region22: #{tpu_custom_call.1} parent=1 // pred_check
      _
    $region23: #{tpu_custom_call.1} parent=1 // pred_check_branch
      %26 = sbr.rel (0) target = $region25
    $region24: #{tpu_custom_call.1} parent=1 // pred_region
      _
    $region25: #{tpu_custom_call.1} parent=1 // pred_fallthru
      _
    // Predicated region
    $region26: #{tpu_custom_call.1} parent=1 // pred_check
      _
    $region27: #{tpu_custom_call.1} parent=1 // pred_check_branch
      %28 = sbr.rel (0) target = $region29
    $region28: #{tpu_custom_call.1} parent=1 // pred_region
      _
    $region29: #{tpu_custom_call.1} parent=1 // pred_fallthru
      _
    %v29 = vld [vmem:[%s1] sm:$0xff]
    %v30 = vld [vmem:[%s1 + $0x8] sm:$0xff]
    %v31 = vld [vmem:[%s1 + $0x10] sm:$0xff]
    %v32 = vld [vmem:[%s1 + $0x18] sm:$0xff]
    %v33 = vld [vmem:[%s0] sm:$0x7]
    %v34 = vld [vmem:[%s2] sm:$0xff]
    %v35 = vld [vmem:[%s2 + $0x8] sm:$0xff]
    %v36 = vld [vmem:[%s2 + $0x10] sm:$0xff]
    %v37 = vld [vmem:[%s2 + $0x18] sm:$0xff]
    %39 = vset.pattern.permute.xlu0 0
    %40 = vperm.xlu0 %39, %v34
    %v41 = vpop.permute.xlu0 %40
    %44 = vset.pattern.permute.xlu0 0
    %45 = vperm.xlu0 %44, %v35
    %v46 = vpop.permute.xlu0 %45
    %49 = vset.pattern.permute.xlu0 0
    %50 = vperm.xlu0 %49, %v36
    %v51 = vpop.permute.xlu0 %50
    %54 = vset.pattern.permute.xlu0 0
    %55 = vperm.xlu0 %54, %v37
    %v56 = vpop.permute.xlu0 %55
    %vm58 = vcmask 23552
    %v60 = vsel %vm58, %v29, 0
    %v63 = vsel %vm58, %v30, 0
    %v66 = vsel %vm58, %v31, 0
    %v69 = vsel %vm58, %v32, 0
    %vm71 = vcmask 1042432
    %v73 = vsel %vm71, %v33, 0
    %75 = vmatpush.msra.mxu0 0.0
    %76 = vmatpush.msra.mxu0 0.0
    %77 = vmatpush.msra.mxu0 0.0
    %78 = vmatpush.msra.mxu0 0.0
    %79 = vmatpush.msra.mxu0 0.0
    %80 = vmatpush.msra.mxu0 0.0
    %81 = vmatpush.msra.mxu0 0.0
    %82 = vmatpush.msra.mxu0 0.0
    %83 = vmatpush.msra.mxu0 0.0
    %84 = vmatpush.msra.mxu0 0.0
    %85 = vmatpush.msra.mxu0 0.0
    %86 = vmatpush.msra.mxu0 0.0
    %87 = vmatpush.msra.mxu0 0.0
    %88 = vmatpush.msra.mxu0 0.0
    %89 = vmatpush.msra.mxu0 0.0
    %90 = vmatpush.msra.mxu0 %v73
    %91 = vmatmul.f32.gmra.mxu0 %v60
    %v92 = vpop.f32.mrf.mxu0
    %v93 = vadd.f32 %v41, %v92
    %94 = vmatmul.f32.gmra.mxu0 %v63
    %v95 = vpop.f32.mrf.mxu0
    %v96 = vadd.f32 %v46, %v95
    %97 = vmatmul.f32.gmra.mxu0 %v66
    %v98 = vpop.f32.mrf.mxu0
    %v99 = vadd.f32 %v51, %v98
    %100 = vmatmul.f32.gmra.mxu0 %v69
    %v101 = vpop.f32.mrf.mxu0
    %v102 = vadd.f32 %v56, %v101
    %103 = vdwg.mxu0
    %v104 = vtanh.pop %v93
    %v105 = vtanh.pop %v96
    %v106 = vtanh.pop %v99
    %v107 = vtanh.pop %v102
    %v108 = vld [vmem:[%s3] sm:$0xff]
    %v109 = vld [vmem:[%s3 + $0x8] sm:$0xff]
    %v110 = vld [vmem:[%s3 + $0x10] sm:$0xff]
    %v111 = vld [vmem:[%s3 + $0x18] sm:$0xff]
    %v112 = vld [vmem:[%s4] sm:$0xff]
    %v113 = vld [vmem:[%s4 + $0x8] sm:$0xff]
    %v114 = vld [vmem:[%s4 + $0x10] sm:$0xff]
    %v115 = vld [vmem:[%s4 + $0x18] sm:$0xff]
    %117 = vset.pattern.permute.xlu0 0
    %118 = vperm.xlu0 %117, %v112
    %v119 = vpop.permute.xlu0 %118
    %122 = vset.pattern.permute.xlu0 0
    %123 = vperm.xlu0 %122, %v113
    %v124 = vpop.permute.xlu0 %123
    %127 = vset.pattern.permute.xlu0 0
    %128 = vperm.xlu0 %127, %v114
    %v129 = vpop.permute.xlu0 %128
    %132 = vset.pattern.permute.xlu0 0
    %133 = vperm.xlu0 %132, %v115
    %v134 = vpop.permute.xlu0 %133
    %vm136 = vcmask 261120
    %v138 = vsel %vm136, %v108, 0
    %v141 = vsel %vm136, %v109, 0
    %v144 = vsel %vm136, %v110, 0
    %v147 = vsel %vm136, %v111, 0
    %149 = vmatpush.msra.mxu0 0.0
    %150 = vmatpush.msra.mxu0 0.0
    %151 = vmatpush.msra.mxu0 0.0
    %152 = vmatpush.msra.mxu0 0.0
    %153 = vmatpush.msra.mxu0 0.0
    %154 = vmatpush.msra.mxu0 0.0
    %155 = vmatpush.msra.mxu0 0.0
    %156 = vmatpush.msra.mxu0 0.0
    %157 = vmatpush.msra.mxu0 0.0
    %158 = vmatpush.msra.mxu0 0.0
    %159 = vmatpush.msra.mxu0 0.0
    %160 = vmatpush.msra.mxu0 0.0
    %161 = vmatpush.msra.mxu0 %v107
    %162 = vmatpush.msra.mxu0 %v106
    %163 = vmatpush.msra.mxu0 %v105
    %164 = vmatpush.msra.mxu0 %v104
    %165 = vmatmul.f32.gmra.mxu0 %v138
    %v166 = vpop.f32.mrf.mxu0
    %v167 = vadd.f32 %v119, %v166
    %168 = vmatmul.f32.gmra.mxu0 %v141
    %v169 = vpop.f32.mrf.mxu0
    %v170 = vadd.f32 %v124, %v169
    %171 = vmatmul.f32.gmra.mxu0 %v144
    %v172 = vpop.f32.mrf.mxu0
    %v173 = vadd.f32 %v129, %v172
    %174 = vmatmul.f32.gmra.mxu0 %v147
    %v175 = vpop.f32.mrf.mxu0
    %v176 = vadd.f32 %v134, %v175
    %177 = vdwg.mxu0
    %v178 = vtanh.pop %v167
    %v179 = vtanh.pop %v170
    %v180 = vtanh.pop %v173
    %v181 = vtanh.pop %v176
    %s182 = scalar_lea.vmem %s3, 32
    %v183 = vld [vmem:[%s182] sm:$0xff]
    %v184 = vld [vmem:[%s182 + $0x8] sm:$0xff]
    %v185 = vld [vmem:[%s182 + $0x10] sm:$0xff]
    %v186 = vld [vmem:[%s182 + $0x18] sm:$0xff]
    %s187 = scalar_lea.vmem %s4, 32
    %v188 = vld [vmem:[%s187] sm:$0xff]
    %v189 = vld [vmem:[%s187 + $0x8] sm:$0xff]
    %v190 = vld [vmem:[%s187 + $0x10] sm:$0xff]
    %v191 = vld [vmem:[%s187 + $0x18] sm:$0xff]
    %193 = vset.pattern.permute.xlu0 0
    %194 = vperm.xlu0 %193, %v188
    %v195 = vpop.permute.xlu0 %194
    %198 = vset.pattern.permute.xlu0 0
    %199 = vperm.xlu0 %198, %v189
    %v200 = vpop.permute.xlu0 %199
    %203 = vset.pattern.permute.xlu0 0
    %204 = vperm.xlu0 %203, %v190
    %v205 = vpop.permute.xlu0 %204
    %208 = vset.pattern.permute.xlu0 0
    %209 = vperm.xlu0 %208, %v191
    %v210 = vpop.permute.xlu0 %209
    %v213 = vsel %vm136, %v183, 0
    %v216 = vsel %vm136, %v184, 0
    %v219 = vsel %vm136, %v185, 0
    %v222 = vsel %vm136, %v186, 0
    %224 = vmatpush.msra.mxu0 0.0
    %225 = vmatpush.msra.mxu0 0.0
    %226 = vmatpush.msra.mxu0 0.0
    %227 = vmatpush.msra.mxu0 0.0
    %228 = vmatpush.msra.mxu0 0.0
    %229 = vmatpush.msra.mxu0 0.0
    %230 = vmatpush.msra.mxu0 0.0
    %231 = vmatpush.msra.mxu0 0.0
    %232 = vmatpush.msra.mxu0 0.0
    %233 = vmatpush.msra.mxu0 0.0
    %234 = vmatpush.msra.mxu0 0.0
    %235 = vmatpush.msra.mxu0 0.0
    %236 = vmatpush.msra.mxu0 %v181
    %237 = vmatpush.msra.mxu0 %v180
    %238 = vmatpush.msra.mxu0 %v179
    %239 = vmatpush.msra.mxu0 %v178
    %240 = vmatmul.f32.gmra.mxu0 %v213
    %v241 = vpop.f32.mrf.mxu0
    %v242 = vadd.f32 %v195, %v241
    %243 = vmatmul.f32.gmra.mxu0 %v216
    %v244 = vpop.f32.mrf.mxu0
    %v245 = vadd.f32 %v200, %v244
    %246 = vmatmul.f32.gmra.mxu0 %v219
    %v247 = vpop.f32.mrf.mxu0
    %v248 = vadd.f32 %v205, %v247
    %249 = vmatmul.f32.gmra.mxu0 %v222
    %v250 = vpop.f32.mrf.mxu0
    %v251 = vadd.f32 %v210, %v250
    %252 = vdwg.mxu0
    %v253 = vtanh.pop %v242
    %v254 = vtanh.pop %v245
    %v255 = vtanh.pop %v248
    %v256 = vtanh.pop %v251
    %v257 = vld [vmem:[%s5] sm:$0x1]
    %v258 = vld [vmem:[#allocation2] sm:$0x1]
    %260 = vset.pattern.permute.xlu0 0
    %261 = vperm.xlu0 %260, %v258
    %v262 = vpop.permute.xlu0 %261
    %v264 = vperm.slane %v262, 0
    %v266 = vsel %vm136, %v257, 0
    %268 = vmatpush.msra.mxu0 0.0
    %269 = vmatpush.msra.mxu0 0.0
    %270 = vmatpush.msra.mxu0 0.0
    %271 = vmatpush.msra.mxu0 0.0
    %272 = vmatpush.msra.mxu0 0.0
    %273 = vmatpush.msra.mxu0 0.0
    %274 = vmatpush.msra.mxu0 0.0
    %275 = vmatpush.msra.mxu0 0.0
    %276 = vmatpush.msra.mxu0 0.0
    %277 = vmatpush.msra.mxu0 0.0
    %278 = vmatpush.msra.mxu0 0.0
    %279 = vmatpush.msra.mxu0 0.0
    %280 = vmatpush.msra.mxu0 %v256
    %281 = vmatpush.msra.mxu0 %v255
    %282 = vmatpush.msra.mxu0 %v254
    %283 = vmatpush.msra.mxu0 %v253
    %284 = vmatmul.f32.gmra.mxu0 %v266
    %v285 = vpop.f32.mrf.mxu0
    %v286 = vadd.f32 %v264, %v285
    %287 = vdwg.mxu0
    %288 = vst [vmem:[#allocation3] sm:$0x1] %v286
    // Predicated region
    $region30: #{tpu_custom_call.1} parent=1 // pred_check
      _
    $region31: #{tpu_custom_call.1} parent=1 // pred_check_branch
      %290 = sbr.rel (0) target = $region33
    $region32: #{tpu_custom_call.1} parent=1 // pred_region
      %292 = vsyncadd [#allocation4], 0
      %s294 = sshll.u32 [#allocation3], 4
      %s295 = int_to_ptr.vmem [resolvable:$true] %s294
      %s296 = sshll.u32 %s7, 4
      %s297 = int_to_ptr.hbm [resolvable:$true] %s296
      %299 = dma.vmem_to_hbm [thread:$0]  %s295, 16, %s297, [#allocation4]
    $region33: #{tpu_custom_call.1} parent=1 // pred_fallthru
      _
    // Predicated region
    $region34: #{tpu_custom_call.1} parent=1 // pred_check
      _
    $region35: #{tpu_custom_call.1} parent=1 // pred_check_branch
      %301 = sbr.rel (0) target = $region37
    $region36: #{tpu_custom_call.1} parent=1 // pred_region
      %303 = dma.done [#allocation4], 16
    $region37: #{tpu_custom_call.1} parent=1 // pred_fallthru
      _
    %304 = vsyncpa [#allocation4], 1

</llo_original>
